<compile_context>
chip_gen: v7x
topology: tpu7x:2x2x1
jax: 0.10.0
libtpu: 0.0.40
codegen_flags: <defaults>
</compile_context>

<pallas_src>
import functools
import math

import jax
import jax.numpy as jnp
import numpy as np
from jax import lax
from jax.experimental import pallas as pl
from jax.experimental.pallas import tpu as pltpu


def _group_norm_kernel(x_ref, wb_ref, o_ref, s_ref, ss_ref, *,
                       channels_per_group, eps, act, inv_count):
    """Two-pass GroupNorm over one (batch, channel-block) slice.

    Grid: (N, C_blocks, pass, HW_chunks); the last two axes are sequential
    ("arbitrary") per (n, cb).

      pass 0           : accumulate per-channel sum / sum-of-squares.
      pass 1, chunk 0  : group stats -> per-channel scale/shift (in scratch).
      pass 1, all k    : y = x*scale + shift (+ optional fused SiLU).

    x_ref  : (1, C_blk, HW_blk) input tile, native dtype (C on sublanes,
                                HW on lanes -> no layout transpose needed)
    wb_ref : (C_blk, 2)         [gamma | beta], f32
    o_ref  : (1, C_blk, HW_blk) output tile
    s_ref, ss_ref : (C_blk, 1)  f32 scratch; [sum, sumsq] during pass 0,
                                reused as [scale, shift] during pass 1.
    """
    p = pl.program_id(2)
    k = pl.program_id(3)

    c_blk = x_ref.shape[1]
    cpg = channels_per_group
    g_blk = c_blk // cpg

    # ---------------- pass 0: accumulate per-channel partial sums ----------
    @pl.when((p == 0) & (k == 0))
    def _init():
        s_ref[...] = jnp.zeros_like(s_ref)
        ss_ref[...] = jnp.zeros_like(ss_ref)

    @pl.when(p == 0)
    def _accumulate():
        x = x_ref[0].astype(jnp.float32)                    # (C_blk, HW_blk)
        s_ref[...] += jnp.sum(x, axis=1, keepdims=True)     # (C_blk, 1)
        ss_ref[...] += jnp.sum(x * x, axis=1, keepdims=True)

    # ------ pass 1, first chunk: group stats -> per-channel scale/shift ----
    @pl.when((p == 1) & (k == 0))
    def _finalize_stats():
        s = s_ref[...]                                      # (C_blk, 1)
        ss = ss_ref[...]                                    # (C_blk, 1)

        # Channel<->group one-hot maps, built once per (n, cb) only inside
        # this branch (both orientations -> no in-kernel transpose); the
        # group reduce / broadcast maps onto the MXU.
        g_row = lax.broadcasted_iota(jnp.int32, (g_blk, c_blk), 0)
        c_row = lax.broadcasted_iota(jnp.int32, (g_blk, c_blk), 1)
        onehot_gc = ((c_row >= g_row * cpg) &
                     (c_row < (g_row + 1) * cpg)).astype(jnp.float32)
        c_col = lax.broadcasted_iota(jnp.int32, (c_blk, g_blk), 0)
        g_col = lax.broadcasted_iota(jnp.int32, (c_blk, g_blk), 1)
        onehot_cg = ((c_col >= g_col * cpg) &
                     (c_col < (g_col + 1) * cpg)).astype(jnp.float32)

        gs = jnp.dot(onehot_gc, s, preferred_element_type=jnp.float32)   # (G,1)
        gss = jnp.dot(onehot_gc, ss, preferred_element_type=jnp.float32)

        mean_g = gs * inv_count
        # One-pass variance in f32; clamp tiny negatives from cancellation.
        var_g = jnp.maximum(gss * inv_count - mean_g * mean_g, 0.0)
        rstd_g = lax.rsqrt(var_g + jnp.float32(eps))

        mean_c = jnp.dot(onehot_cg, mean_g, preferred_element_type=jnp.float32)
        rstd_c = jnp.dot(onehot_cg, rstd_g, preferred_element_type=jnp.float32)

        wb = wb_ref[...]                                    # (C_blk, 2) f32
        gamma = wb[:, 0:1]
        beta = wb[:, 1:2]
        scale_c = rstd_c * gamma
        shift_c = beta - mean_c * scale_c

        s_ref[...] = scale_c          # scratch now holds [scale, shift]
        ss_ref[...] = shift_c

    # ---------------- pass 1: normalize + affine (+ fused SiLU) ------------
    @pl.when(p == 1)
    def _normalize():
        x = x_ref[0].astype(jnp.float32)                    # (C_blk, HW_blk)
        y = x * s_ref[...] + ss_ref[...]
        if act in ("silu", "swish"):
            y = y * jax.nn.sigmoid(y)
        o_ref[0] = y.astype(o_ref.dtype)


def _pick_c_block(C, cpg, max_c_block):
    """Channel block: multiple of the group size and of 8 sublanes, divides C."""
    step = (cpg * 8) // math.gcd(cpg, 8)          # lcm(cpg, 8)
    if C <= max_c_block or step > max_c_block:
        return C
    blk = (max_c_block // step) * step
    while blk >= step:
        if C % blk == 0:
            return blk
        blk -= step
    return C


def _pick_hw_block(HW, c_blk, max_tile_bytes):
    """HW chunk: multiple of 128 lanes (or full HW), divides HW, fits budget."""
    row_bytes = c_blk * 4                          # f32 working set per position
    if HW * row_bytes <= max_tile_bytes:
        return HW                                  # whole slab stays resident
    max_rows = max(max_tile_bytes // row_bytes, 128)
    blk = max((max_rows // 128) * 128, 128)
    while blk >= 128:
        if HW % blk == 0:
            return blk
        blk -= 128
    # TODO(synk): HW with no multiple-of-128 divisor under budget; fall back
    # to a single full-HW block instead of masking partial lane blocks.
    return HW


def group_norm(x_nchw, num_groups, weight, bias, eps=1e-5, act="",
               *, max_tile_bytes=2 * 1024 * 1024, max_c_block=1024):
    """Forward pass of apex GroupNorm (optionally fused with SiLU).

    Matches torch_group_norm semantics: stats/affine math runs in (at least)
    the weight dtype -- here f32 -- and the result is returned in the input
    dtype.  No layout transposes and no promoted HBM copy of x are made.
    """
    act = act.lower()
    assert act in ("", "silu", "swish"), "Unsupported activation."
    N, C, H, W = x_nchw.shape
    G = num_groups
    assert C % G == 0, "C % G != 0."
    assert weight.shape == (C,) and bias.shape == (C,)
    cpg = C // G
    HW = H * W

    x = x_nchw.reshape(N, C, HW)                      # free: contiguous dims
    wb = jnp.stack([weight.astype(jnp.float32),
                    bias.astype(jnp.float32)], axis=1)  # (C, 2), tiny

    c_blk = _pick_c_block(C, cpg, max_c_block)
    hw_blk = _pick_hw_block(HW, c_blk, max_tile_bytes)
    n_cb = C // c_blk
    n_hw = HW // hw_blk

    kernel = functools.partial(
        _group_norm_kernel,
        channels_per_group=cpg,
        eps=float(eps),
        act=act,
        inv_count=1.0 / float(HW * cpg),
    )

    # Rough VMEM need: double-buffered in/out tiles (native dtype), f32
    # temporaries, lane-padded params + scratch.  Normal tile picks stay well
    # under 32 MiB; cap at 64 MiB (v7x physical VMEM).
    tile_elems = c_blk * hw_blk
    est = (4 * tile_elems * x.dtype.itemsize
           + 3 * tile_elems * 4
           + 6 * c_blk * 128 * 4)
    vmem_limit = int(min(max(32 * 1024 * 1024, est * 1.25), 64 * 1024 * 1024))

    out = pl.pallas_call(
        kernel,
        out_shape=jax.ShapeDtypeStruct((N, C, HW), x.dtype),
        grid_spec=pltpu.PrefetchScalarGridSpec(
            num_scalar_prefetch=0,
            grid=(N, n_cb, 2, n_hw),
            in_specs=[
                pl.BlockSpec((1, c_blk, hw_blk),
                             lambda n, cb, p, k: (n, cb, k)),
                pl.BlockSpec((c_blk, 2),
                             lambda n, cb, p, k: (cb, 0)),
            ],
            # During pass 0 the output block index is pinned to chunk 0 so the
            # (untouched) output buffer is never written back; each output
            # block is written exactly once, during pass 1.
            out_specs=pl.BlockSpec((1, c_blk, hw_blk),
                                   lambda n, cb, p, k: (n, cb, p * k)),
            scratch_shapes=[
                pltpu.VMEM((c_blk, 1), jnp.float32),   # sum   -> scale
                pltpu.VMEM((c_blk, 1), jnp.float32),   # sumsq -> shift
            ],
        ),
        compiler_params=pltpu.CompilerParams(
            dimension_semantics=("parallel", "parallel",
                                 "arbitrary", "arbitrary"),
            vmem_limit_bytes=vmem_limit,
        ),
    )(x, wb)

    return out.reshape(N, C, H, W)


def _reference_group_norm(x, G, w, b, eps, act=""):
    """Pure-JAX reference (mirrors torch.nn.functional.group_norm + silu)."""
    N, C, H, W = x.shape
    xf = x.astype(jnp.float32).reshape(N, G, C // G, H, W)
    mean = xf.mean(axis=(2, 3, 4), keepdims=True)
    var = ((xf - mean) ** 2).mean(axis=(2, 3, 4), keepdims=True)
    y = (xf - mean) / jnp.sqrt(var + eps)
    y = y.reshape(N, C, H, W)
    y = (y * w.astype(jnp.float32).reshape(1, C, 1, 1)
         + b.astype(jnp.float32).reshape(1, C, 1, 1))
    if act in ("silu", "swish"):
        y = y * jax.nn.sigmoid(y)
    return y.astype(x.dtype)


if __name__ == "__main__":
    key = jax.random.PRNGKey(0)
    k1, k2, k3, k4, k5 = jax.random.split(key, 5)
    eps = 1e-5

    # Case 1: f32, G=16 — whole sample fits one block (single HBM read path).
    N, C, H, W, G = 2, 64, 8, 8, 16
    x = jax.random.normal(k1, (N, C, H, W), dtype=jnp.float32)
    w = 1.0 + 0.1 * jax.random.normal(k2, (C,), dtype=jnp.float32)
    b = 0.1 * jax.random.normal(k3, (C,), dtype=jnp.float32)

    y_plain = group_norm(x, G, w, b, eps, act="")
    y_silu = group_norm(x, G, w, b, eps, act="silu")
    jax.block_until_ready((y_plain, y_silu))

    np.testing.assert_allclose(
        np.asarray(y_plain),
        np.asarray(_reference_group_norm(x, G, w, b, eps, "")),
        rtol=1e-4, atol=1e-4)
    np.testing.assert_allclose(
        np.asarray(y_silu),
        np.asarray(_reference_group_norm(x, G, w, b, eps, "silu")),
        rtol=1e-4, atol=1e-4)

    # Case 2: bf16 activations + f32 affine (mixed dtype), fused SiLU, G=32.
    # Small tile budget / channel-block cap force the chunked two-pass path
    # with a parallel channel-block grid axis.
    N2, C2, H2, W2, G2 = 1, 256, 16, 16, 32
    x2 = jax.random.normal(k4, (N2, C2, H2, W2), dtype=jnp.bfloat16)
    w2 = 1.0 + 0.1 * jax.random.normal(k5, (C2,), dtype=jnp.float32)
    b2 = 0.1 * jax.random.normal(k2, (C2,), dtype=jnp.float32)

    y2 = group_norm(x2, G2, w2, b2, eps, act="silu",
                    max_tile_bytes=64 * 1024, max_c_block=128)
    jax.block_until_ready(y2)
    ref2 = _reference_group_norm(x2, G2, w2, b2, eps, "silu")
    np.testing.assert_allclose(
        np.asarray(y2.astype(jnp.float32)),
        np.asarray(ref2.astype(jnp.float32)),
        rtol=2e-2, atol=2e-2)

    print("KERNEL_OK")
</pallas_src>

<mosaic_0001>
module attributes {stable_mosaic.version = 11 : i64} {
  func.func @_group_norm_kernel(%arg0: i32, %arg1: i32, %arg2: i32, %arg3: i32, %arg4: memref<1x64x64xf32, #tpu.memory_space<vmem>>, %arg5: memref<64x2xf32, #tpu.memory_space<vmem>>, %arg6: memref<1x64x64xf32, #tpu.memory_space<vmem>>, %arg7: memref<64x1xf32, #tpu.memory_space<vmem>>, %arg8: memref<64x1xf32, #tpu.memory_space<vmem>>) attributes {dimension_semantics = [#tpu.dimension_semantics<parallel>, #tpu.dimension_semantics<parallel>, #tpu.dimension_semantics<arbitrary>, #tpu.dimension_semantics<arbitrary>], iteration_bounds = array<i64: 2, 1, 2, 1>, scalar_prefetch = 0 : i64, scratch_operands = 2 : i64, tpu.core_type = #tpu.core_type<tc>, window_params = [{transform_indices = @transform_0, window_bounds = array<i64: 1, 64, 64>}, {transform_indices = @transform_1, window_bounds = array<i64: 64, 2>}, {transform_indices = @transform_2, window_bounds = array<i64: 1, 64, 64>}]} {
    %c0_i32 = arith.constant 0 : i32
    %0 = arith.cmpi eq, %arg2, %c0_i32 : i32
    %c0_i32_0 = arith.constant 0 : i32
    %1 = arith.cmpi eq, %arg3, %c0_i32_0 : i32
    %2 = arith.andi %0, %1 : i1
    %3 = arith.extui %2 : i1 to i32
    %c0_i32_1 = arith.constant 0 : i32
    %4 = arith.cmpi ne, %3, %c0_i32_1 : i32
    scf.if %4 {
      %cst = arith.constant 0.000000e+00 : f32
      %16 = vector.broadcast %cst : f32 to vector<64x1xf32>
      %c0 = arith.constant 0 : index
      %c0_8 = arith.constant 0 : index
      %17 = vector.load %arg7[%c0, %c0_8] : memref<64x1xf32, #tpu.memory_space<vmem>>, vector<64x1xf32>
      tpu.vector_store %arg7[%c0, %c0_8], %16 {strides = array<i32>} : memref<64x1xf32, #tpu.memory_space<vmem>>, vector<64x1xf32>,
      %cst_9 = arith.constant 0.000000e+00 : f32
      %18 = vector.broadcast %cst_9 : f32 to vector<64x1xf32>
      %c0_10 = arith.constant 0 : index
      %c0_11 = arith.constant 0 : index
      %19 = vector.load %arg8[%c0_10, %c0_11] : memref<64x1xf32, #tpu.memory_space<vmem>>, vector<64x1xf32>
      tpu.vector_store %arg8[%c0_10, %c0_11], %18 {strides = array<i32>} : memref<64x1xf32, #tpu.memory_space<vmem>>, vector<64x1xf32>,
    } else {
    }
    %c0_i32_2 = arith.constant 0 : i32
    %5 = arith.cmpi eq, %arg2, %c0_i32_2 : i32
    %6 = arith.extui %5 : i1 to i32
    %c0_i32_3 = arith.constant 0 : i32
    %7 = arith.cmpi ne, %6, %c0_i32_3 : i32
    scf.if %7 {
      %c0 = arith.constant 0 : index
      %c0_8 = arith.constant 0 : index
      %c0_9 = arith.constant 0 : index
      %16 = vector.load %arg4[%c0, %c0_8, %c0_9] : memref<1x64x64xf32, #tpu.memory_space<vmem>>, vector<1x64x64xf32>
      %17 = vector.shape_cast %16 : vector<1x64x64xf32> to vector<64x64xf32>
      %c0_10 = arith.constant 0 : index
      %c0_11 = arith.constant 0 : index
      %18 = vector.load %arg7[%c0_10, %c0_11] : memref<64x1xf32, #tpu.memory_space<vmem>>, vector<64x1xf32>
      %cst = arith.constant dense<0.000000e+00> : vector<64xf32>
      %19 = vector.multi_reduction <add>, %17, %cst [1] : vector<64x64xf32> to vector<64xf32>
      %20 = vector.shape_cast %19 : vector<64xf32> to vector<64x1xf32>
      %21 = arith.addf %18, %20 : vector<64x1xf32>
      %c0_12 = arith.constant 0 : index
      %c0_13 = arith.constant 0 : index
      %22 = vector.load %arg7[%c0_12, %c0_13] : memref<64x1xf32, #tpu.memory_space<vmem>>, vector<64x1xf32>
      tpu.vector_store %arg7[%c0_12, %c0_13], %21 {strides = array<i32>} : memref<64x1xf32, #tpu.memory_space<vmem>>, vector<64x1xf32>,
      %c0_14 = arith.constant 0 : index
      %c0_15 = arith.constant 0 : index
      %23 = vector.load %arg8[%c0_14, %c0_15] : memref<64x1xf32, #tpu.memory_space<vmem>>, vector<64x1xf32>
      %24 = arith.mulf %17, %17 : vector<64x64xf32>
      %cst_16 = arith.constant dense<0.000000e+00> : vector<64xf32>
      %25 = vector.multi_reduction <add>, %24, %cst_16 [1] : vector<64x64xf32> to vector<64xf32>
      %26 = vector.shape_cast %25 : vector<64xf32> to vector<64x1xf32>
      %27 = arith.addf %23, %26 : vector<64x1xf32>
      %c0_17 = arith.constant 0 : index
      %c0_18 = arith.constant 0 : index
      %28 = vector.load %arg8[%c0_17, %c0_18] : memref<64x1xf32, #tpu.memory_space<vmem>>, vector<64x1xf32>
      tpu.vector_store %arg8[%c0_17, %c0_18], %27 {strides = array<i32>} : memref<64x1xf32, #tpu.memory_space<vmem>>, vector<64x1xf32>,
    } else {
    }
    %c1_i32 = arith.constant 1 : i32
    %8 = arith.cmpi eq, %arg2, %c1_i32 : i32
    %c0_i32_4 = arith.constant 0 : i32
    %9 = arith.cmpi eq, %arg3, %c0_i32_4 : i32
    %10 = arith.andi %8, %9 : i1
    %11 = arith.extui %10 : i1 to i32
    %c0_i32_5 = arith.constant 0 : i32
    %12 = arith.cmpi ne, %11, %c0_i32_5 : i32
    scf.if %12 {
      %c0 = arith.constant 0 : index
      %c0_8 = arith.constant 0 : index
      %16 = vector.load %arg7[%c0, %c0_8] : memref<64x1xf32, #tpu.memory_space<vmem>>, vector<64x1xf32>
      %c0_9 = arith.constant 0 : index
      %c0_10 = arith.constant 0 : index
      %17 = vector.load %arg8[%c0_9, %c0_10] : memref<64x1xf32, #tpu.memory_space<vmem>>, vector<64x1xf32>
      %18 = tpu.iota {dimensions = array<i32: 0>} : vector<16x64xi32>
      %19 = tpu.iota {dimensions = array<i32: 1>} : vector<16x64xi32>
      %c4_i32 = arith.constant 4 : i32
      %20 = vector.broadcast %c4_i32 : i32 to vector<16x64xi32>
      %21 = arith.muli %18, %20 : vector<16x64xi32>
      %22 = arith.cmpi sge, %19, %21 : vector<16x64xi32>
      %c1_i32_11 = arith.constant 1 : i32
      %23 = vector.broadcast %c1_i32_11 : i32 to vector<16x64xi32>
      %24 = arith.addi %18, %23 : vector<16x64xi32>
      %c4_i32_12 = arith.constant 4 : i32
      %25 = vector.broadcast %c4_i32_12 : i32 to vector<16x64xi32>
      %26 = arith.muli %24, %25 : vector<16x64xi32>
      %27 = arith.cmpi slt, %19, %26 : vector<16x64xi32>
      %28 = arith.andi %22, %27 : vector<16x64xi1>
      %29 = arith.extui %28 : vector<16x64xi1> to vector<16x64xi32>
      %30 = arith.sitofp %29 : vector<16x64xi32> to vector<16x64xf32>
      %31 = tpu.iota {dimensions = array<i32: 0>} : vector<64x16xi32>
      %32 = tpu.iota {dimensions = array<i32: 1>} : vector<64x16xi32>
      %c4_i32_13 = arith.constant 4 : i32
      %33 = vector.broadcast %c4_i32_13 : i32 to vector<64x16xi32>
      %34 = arith.muli %32, %33 : vector<64x16xi32>
      %35 = arith.cmpi sge, %31, %34 : vector<64x16xi32>
      %c1_i32_14 = arith.constant 1 : i32
      %36 = vector.broadcast %c1_i32_14 : i32 to vector<64x16xi32>
      %37 = arith.addi %32, %36 : vector<64x16xi32>
      %c4_i32_15 = arith.constant 4 : i32
      %38 = vector.broadcast %c4_i32_15 : i32 to vector<64x16xi32>
      %39 = arith.muli %37, %38 : vector<64x16xi32>
      %40 = arith.cmpi slt, %31, %39 : vector<64x16xi32>
      %41 = arith.andi %35, %40 : vector<64x16xi1>
      %42 = arith.extui %41 : vector<64x16xi1> to vector<64x16xi32>
      %43 = arith.sitofp %42 : vector<64x16xi32> to vector<64x16xf32>
      %cst = arith.constant dense<0.000000e+00> : vector<16x1xf32>
      %44 = tpu.matmul %30, %16, %cst {dimension_numbers = #tpu.dot_dimension_numbers<[1], [0], [0], [1], [0, 0, 1, 1], [], []>} : vector<16x64xf32>, vector<64x1xf32>, vector<16x1xf32> -> vector<16x1xf32>
      %cst_16 = arith.constant dense<0.000000e+00> : vector<16x1xf32>
      %45 = tpu.matmul %30, %17, %cst_16 {dimension_numbers = #tpu.dot_dimension_numbers<[1], [0], [0], [1], [0, 0, 1, 1], [], []>} : vector<16x64xf32>, vector<64x1xf32>, vector<16x1xf32> -> vector<16x1xf32>
      %cst_17 = arith.constant 3.906250e-03 : f32
      %46 = vector.broadcast %cst_17 : f32 to vector<16x1xf32>
      %47 = arith.mulf %44, %46 : vector<16x1xf32>
      %cst_18 = arith.constant 3.906250e-03 : f32
      %48 = vector.broadcast %cst_18 : f32 to vector<16x1xf32>
      %49 = arith.mulf %45, %48 : vector<16x1xf32>
      %50 = arith.mulf %47, %47 : vector<16x1xf32>
      %51 = arith.subf %49, %50 : vector<16x1xf32>
      %cst_19 = arith.constant 0.000000e+00 : f32
      %52 = vector.broadcast %cst_19 : f32 to vector<16x1xf32>
      %53 = arith.maximumf %51, %52 : vector<16x1xf32>
      %cst_20 = arith.constant 9.99999974E-6 : f32
      %54 = vector.broadcast %cst_20 : f32 to vector<16x1xf32>
      %55 = arith.addf %53, %54 : vector<16x1xf32>
      %56 = math.rsqrt %55 : vector<16x1xf32>
      %cst_21 = arith.constant dense<0.000000e+00> : vector<64x1xf32>
      %57 = tpu.matmul %43, %47, %cst_21 {dimension_numbers = #tpu.dot_dimension_numbers<[1], [0], [0], [1], [0, 0, 1, 1], [], []>} : vector<64x16xf32>, vector<16x1xf32>, vector<64x1xf32> -> vector<64x1xf32>
      %cst_22 = arith.constant dense<0.000000e+00> : vector<64x1xf32>
      %58 = tpu.matmul %43, %56, %cst_22 {dimension_numbers = #tpu.dot_dimension_numbers<[1], [0], [0], [1], [0, 0, 1, 1], [], []>} : vector<64x16xf32>, vector<16x1xf32>, vector<64x1xf32> -> vector<64x1xf32>
      %c0_23 = arith.constant 0 : index
      %c0_24 = arith.constant 0 : index
      %59 = vector.load %arg5[%c0_23, %c0_24] : memref<64x2xf32, #tpu.memory_space<vmem>>, vector<64x2xf32>
      %60 = vector.extract_strided_slice %59 {offsets = [0, 0], sizes = [64, 1], strides = [1, 1]} : vector<64x2xf32> to vector<64x1xf32>
      %61 = vector.extract_strided_slice %59 {offsets = [0, 1], sizes = [64, 1], strides = [1, 1]} : vector<64x2xf32> to vector<64x1xf32>
      %62 = arith.mulf %58, %60 : vector<64x1xf32>
      %63 = arith.mulf %57, %62 : vector<64x1xf32>
      %64 = arith.subf %61, %63 : vector<64x1xf32>
      %c0_25 = arith.constant 0 : index
      %c0_26 = arith.constant 0 : index
      %65 = vector.load %arg7[%c0_25, %c0_26] : memref<64x1xf32, #tpu.memory_space<vmem>>, vector<64x1xf32>
      tpu.vector_store %arg7[%c0_25, %c0_26], %62 {strides = array<i32>} : memref<64x1xf32, #tpu.memory_space<vmem>>, vector<64x1xf32>,
      %c0_27 = arith.constant 0 : index
      %c0_28 = arith.constant 0 : index
      %66 = vector.load %arg8[%c0_27, %c0_28] : memref<64x1xf32, #tpu.memory_space<vmem>>, vector<64x1xf32>
      tpu.vector_store %arg8[%c0_27, %c0_28], %64 {strides = array<i32>} : memref<64x1xf32, #tpu.memory_space<vmem>>, vector<64x1xf32>,
    } else {
    }
    %c1_i32_6 = arith.constant 1 : i32
    %13 = arith.cmpi eq, %arg2, %c1_i32_6 : i32
    %14 = arith.extui %13 : i1 to i32
    %c0_i32_7 = arith.constant 0 : i32
    %15 = arith.cmpi ne, %14, %c0_i32_7 : i32
    scf.if %15 {
      %c0 = arith.constant 0 : index
      %c0_8 = arith.constant 0 : index
      %c0_9 = arith.constant 0 : index
      %16 = vector.load %arg4[%c0, %c0_8, %c0_9] : memref<1x64x64xf32, #tpu.memory_space<vmem>>, vector<1x64x64xf32>
      %17 = vector.shape_cast %16 : vector<1x64x64xf32> to vector<64x64xf32>
      %c0_10 = arith.constant 0 : index
      %c0_11 = arith.constant 0 : index
      %18 = vector.load %arg7[%c0_10, %c0_11] : memref<64x1xf32, #tpu.memory_space<vmem>>, vector<64x1xf32>
      %19 = vector.broadcast %18 : vector<64x1xf32> to vector<64x64xf32>
      %20 = arith.mulf %17, %19 : vector<64x64xf32>
      %c0_12 = arith.constant 0 : index
      %c0_13 = arith.constant 0 : index
      %21 = vector.load %arg8[%c0_12, %c0_13] : memref<64x1xf32, #tpu.memory_space<vmem>>, vector<64x1xf32>
      %22 = vector.broadcast %21 : vector<64x1xf32> to vector<64x64xf32>
      %23 = arith.addf %20, %22 : vector<64x64xf32>
      %c0_14 = arith.constant 0 : index
      %c0_15 = arith.constant 0 : index
      %c0_16 = arith.constant 0 : index
      %24 = vector.load %arg6[%c0_14, %c0_15, %c0_16] : memref<1x64x64xf32, #tpu.memory_space<vmem>>, vector<1x64x64xf32>
      %25 = vector.shape_cast %24 : vector<1x64x64xf32> to vector<64x64xf32>
      %26 = vector.shape_cast %23 : vector<64x64xf32> to vector<1x64x64xf32>
      tpu.vector_store %arg6[%c0_14, %c0_15, %c0_16], %26 {strides = array<i32>} : memref<1x64x64xf32, #tpu.memory_space<vmem>>, vector<1x64x64xf32>,
    } else {
    }
    return
  }
  func.func @transform_0(%arg0: i32, %arg1: i32, %arg2: i32, %arg3: i32) -> (i32, i32, i32) {
    %c0_i32 = arith.constant 0 : i32
    return %arg0, %arg1, %arg3 : i32, i32, i32
  }
  func.func @transform_1(%arg0: i32, %arg1: i32, %arg2: i32, %arg3: i32) -> (i32, i32) {
    %c0_i32 = arith.constant 0 : i32
    %c0_i32_0 = arith.constant 0 : i32
    return %arg1, %c0_i32 : i32, i32
  }
  func.func @transform_2(%arg0: i32, %arg1: i32, %arg2: i32, %arg3: i32) -> (i32, i32, i32) {
    %0 = arith.muli %arg2, %arg3 : i32
    %c0_i32 = arith.constant 0 : i32
    return %arg0, %arg1, %0 : i32, i32, i32
  }
}

</mosaic_0001>

<llo_original>
// kernel: tpu_custom_call.1
$region0: #{tpu_custom_call.1}
  #allocation0 [shape = 'u32[]', space=smem, size = 0x4, offset = 0x4, fixed_abs, tag = 'smem constant byte address 0x4 - core index']
  #allocation1 [shape = 'u32[144,128]{1,0:T(1,128)}', space=vmem, size = 0x12000, scoped, tag = 'internal scratch']
  #allocation2 [shape = 'f32[64,1]{1,0:T(8,128)}', space=vmem, size = 0x8000, scoped, tag = 'scratch operand']
  #allocation3 [shape = 'f32[64,1]{1,0:T(8,128)}', space=vmem, size = 0x8000, scoped, tag = 'scratch operand']
  %s0 = inlined_call_operand.hbm [shape: f32[2,64,64], index: 0, kind: input, shape index: {}]
  %s1 = inlined_call_operand.vmem [shape: f32[64,2], index: 1, kind: input, shape index: {}]
  %s2 = inlined_call_operand.hbm [shape: f32[2,64,64], index: 2, kind: output, shape index: {}]
  %s3 = sld [smem:[#allocation0]]
  $region61: #{tpu_custom_call.1} parent=0
    _
  %s5 = ssub.s32 1, %s3
  %s6 = scalar_select 0, %s5, %s3
  $region1: #{tpu_custom_call.1} parent=0
    #allocation4 [shape = 'u8[65536]{0}', space=vmem, size = 0x10000, scoped, tag = 'input window, operand 0']
    #allocation5 [shape = 's32[2]{0}', space=sflag, size = 0x8, scoped, tag = 'scoped memory for tpu_custom_call.1']
    #allocation6 [shape = 's32[2]{0}', space=sflag, size = 0x8, scoped, tag = 'scoped memory for tpu_custom_call.1']
    #allocation7 [shape = 'u8[65536]{0}', space=vmem, size = 0x10000, scoped, tag = 'output window, operand 0']
    %7 = vsyncpa [#allocation5], 0
    %s8 = scalar_lea.sflag [#allocation5], 1
    %9 = vsyncpa %s8, 0
    %10 = vsyncpa [#allocation6], 0
    %s11 = scalar_lea.sflag [#allocation6], 1
    %12 = vsyncpa %s11, 0
    loop: start=0, step=1, limit=6
    $region2: #{tpu_custom_call.1} parent=1 // loop_pre_header
      _
    $region3: #{tpu_custom_call.1} parent=1 // loop_header
      %s14 = sphi 0, %s18
      %p15 = scmp.ge.s32.totalorder %s14, 6
      %s21 = sphi 0, %s47
      %s22 = sphi 0, %s43
      %s23 = sphi 0, %s39
      %s24 = sphi 0, %s35
      %s25 = sphi 0, %s21
      %s26 = sphi 0, %s22
      %s27 = sphi 0, %s23
      %s28 = sphi 0, %s24
      %s29 = sphi 0, %s25
      %s30 = sphi 0, %s26
      %s31 = sphi 0, %s27
      %s32 = sphi 0, %s28
      %s54 = sphi 0, %s56
      %s57 = sphi 0, %s54
      %s58 = sphi 0, %s57
      %s74 = sphi 0, %s58
      %s80 = sphi 0, %s82
      %s83 = sphi 0, %s80
      %s84 = sphi 0, %s83
      %s100 = sphi 0, %s84
      %s112 = sphi 0, %s114
      %s115 = sphi 0, %s112
      %s116 = sphi 0, %s115
      %s132 = sphi 0, %s116
    $region4: #{tpu_custom_call.1} parent=1 // loop_header_branch
      %17 = sbr.rel (%p15) target = $region8
    $region5: #{tpu_custom_call.1} parent=1 // loop_body
      %s19 = ssub.s32 %s14, 1
      %s20 = ssub.s32 %s14, 2
      %s33 = sadd.s32 1, %s24
      %p34 = scmp.ge.s32.totalorder %s33, 1
      %s35 = scalar_select %p34, 0, %s33
      %s36 = sadd.s32 1, %s23
      %s37 = scalar_select %p34, %s36, %s23
      %p38 = scmp.ge.s32.totalorder %s37, 2
      %s39 = scalar_select %p38, 0, %s37
      %s40 = sadd.s32 1, %s22
      %s41 = scalar_select %p38, %s40, %s22
      %p42 = scmp.ge.s32.totalorder %s41, 1
      %s43 = scalar_select %p42, 0, %s41
      %s44 = sadd.s32 1, %s21
      %s45 = scalar_select %p42, %s44, %s21
      %p46 = scmp.ge.s32.totalorder %s45, 2
      %s47 = scalar_select %p46, 0, %s45
      %s48 = ssub.s32 %s21, %s47
      %s49 = ssub.s32 %s22, %s43
      %s50 = sor.u32 %s48, %s49
      %s51 = ssub.s32 %s24, %s35
      %s52 = sor.u32 %s50, %s51
      %p53 = scmp.eq.s32.totalorder %s52, 0
      %s55 = sadd.s32 %s54, 1
      %s56 = scalar_select %p53, %s54, %s55
      %p59 = pneg %p53
      %p60 = scmp.eq.s32.totalorder %s14, 3
      %p61 = por %p59, %p60
      %p62 = scmp.ne.s32.totalorder %s54, %s57
      %p63 = scmp.eq.s32.totalorder %s14, 0
      %p64 = por %p62, %p63
      %p65 = scmp.ne.s32.totalorder %s54, %s57
      %p66 = scmp.eq.s32.totalorder %s19, 3
      %p67 = por %p65, %p66
      %p68 = scmp.ne.s32.totalorder %s57, %s58
      %p69 = scmp.eq.s32.totalorder %s19, 0
      %p70 = por %p68, %p69
      %p71 = scmp.ne.s32.totalorder %s57, %s58
      %p72 = scmp.eq.s32.totalorder %s20, 3
      %p73 = por %p71, %p72
      %p75 = scmp.ne.s32.totalorder %s58, %s74
      %p76 = scmp.eq.s32.totalorder %s20, 0
      %p77 = por %p75, %p76
      %s78 = ssub.s32 %s22, %s43
      %p79 = scmp.eq.s32.totalorder %s78, 0
      %s81 = sadd.s32 %s80, 1
      %s82 = scalar_select %p79, %s80, %s81
      %p85 = pneg %p79
      %p86 = scmp.eq.s32.totalorder %s14, 3
      %p87 = por %p85, %p86
      %p88 = scmp.ne.s32.totalorder %s80, %s83
      %p89 = scmp.eq.s32.totalorder %s14, 0
      %p90 = por %p88, %p89
      %p91 = scmp.ne.s32.totalorder %s80, %s83
      %p92 = scmp.eq.s32.totalorder %s19, 3
      %p93 = por %p91, %p92
      %p94 = scmp.ne.s32.totalorder %s83, %s84
      %p95 = scmp.eq.s32.totalorder %s19, 0
      %p96 = por %p94, %p95
      %p97 = scmp.ne.s32.totalorder %s83, %s84
      %p98 = scmp.eq.s32.totalorder %s20, 3
      %p99 = por %p97, %p98
      %p101 = scmp.ne.s32.totalorder %s84, %s100
      %p102 = scmp.eq.s32.totalorder %s20, 0
      %p103 = por %p101, %p102
      %s104 = smul.u32 %s23, %s24
      %s105 = smul.u32 %s39, %s35
      %s106 = ssub.s32 %s21, %s47
      %s107 = ssub.s32 %s22, %s43
      %s108 = sor.u32 %s106, %s107
      %s109 = ssub.s32 %s104, %s105
      %s110 = sor.u32 %s108, %s109
      %p111 = scmp.eq.s32.totalorder %s110, 0
      %s113 = sadd.s32 %s112, 1
      %s114 = scalar_select %p111, %s112, %s113
      %p117 = pneg %p111
      %p118 = scmp.eq.s32.totalorder %s14, 3
      %p119 = por %p117, %p118
      %p120 = scmp.ne.s32.totalorder %s112, %s115
      %p121 = scmp.eq.s32.totalorder %s14, 0
      %p122 = por %p120, %p121
      %p123 = scmp.ne.s32.totalorder %s112, %s115
      %p124 = scmp.eq.s32.totalorder %s19, 3
      %p125 = por %p123, %p124
      %p126 = scmp.ne.s32.totalorder %s115, %s116
      %p127 = scmp.eq.s32.totalorder %s19, 0
      %p128 = por %p126, %p127
      %p129 = scmp.ne.s32.totalorder %s115, %s116
      %p130 = scmp.eq.s32.totalorder %s20, 3
      %p131 = por %p129, %p130
      %p133 = scmp.ne.s32.totalorder %s116, %s132
      %p134 = scmp.eq.s32.totalorder %s20, 0
      %p135 = por %p133, %p134
      %p136 = scmp.le.s32.totalorder 1, %s14
      %p137 = scmp.lt.s32.totalorder %s14, 5
      %p138 = pnand %p136, %p137
      %p139 = pneg %p138
      // Predicated region
      $region9: #{tpu_custom_call.1} parent=5 // pred_check
        _
      $region10: #{tpu_custom_call.1} parent=5 // pred_check_branch
        %141 = sbr.rel (%p138) target = $region12
      $region11: #{tpu_custom_call.1} parent=5 // pred_region
        %s142 = ssub.s32 %s14, 1
        // Predicated region
        $region13: #{tpu_custom_call.1} parent=11 // pred_check
          %p143 = pneg %p96
        $region14: #{tpu_custom_call.1} parent=11 // pred_check_branch
          %145 = sbr.rel (%p143) target = $region16
        $region15: #{tpu_custom_call.1} parent=11 // pred_region
          %s146 = smul.u32 8, %s26
          %p147 = scmp.lt.s32.totalorder %s146, 7
          %s148 = scalar_select %p147, %s146, 7
          %s149 = smul.addr %s148, 8
          %s150 = scalar_lea.vmem %s1, %s149
          %s151 = smul.u32 8, %s26
        $region16: #{tpu_custom_call.1} parent=11 // pred_fallthru
          _
      $region12: #{tpu_custom_call.1} parent=5 // pred_fallthru
        _
      %p152 = scmp.lt.s32.totalorder %s14, 4
      // Predicated region
      $region17: #{tpu_custom_call.1} parent=5 // pred_check
        %p153 = pneg %p152
      $region18: #{tpu_custom_call.1} parent=5 // pred_check_branch
        %155 = sbr.rel (%p153) target = $region20
      $region19: #{tpu_custom_call.1} parent=5 // pred_region
        // Predicated region
        $region21: #{tpu_custom_call.1} parent=19 // pred_check
          %p156 = pneg %p64
        $region22: #{tpu_custom_call.1} parent=19 // pred_check_branch
          %158 = sbr.rel (%p156) target = $region24
        $region23: #{tpu_custom_call.1} parent=19 // pred_region
          %s159 = sand.u32 %s54, 1
          %s160 = scalar_lea.sflag [#allocation5], %s159
          %s161 = sand.u32 %s54, 1
          %s162 = smul.addr %s161, 64
          %s163 = scalar_lea.vmem [#allocation4], %s162
          %s164 = smul.u32 8, %s22
          %s166 = ssub.s32 1024, 1024
          %167 = vsyncadd %s160, %s166
          %s168 = sadd.s32 %s24, %s164
          %s169 = smul.addr %s21, 8
          %s170 = sadd.s32 %s168, %s169
          %s171 = smul.addr %s170, 128
          %s172 = scalar_lea.hbm %s0, %s171
          %s173 = sshll.u32 %s163, 4
          %s174 = int_to_ptr.vmem [resolvable:$true] %s173
          %179 = dma.hbm_to_vmem [thread:$0]  %s172, 1024, %s174, %s160, 128, 128, 8
        $region24: #{tpu_custom_call.1} parent=19 // pred_fallthru
          _
      $region20: #{tpu_custom_call.1} parent=5 // pred_fallthru
        _
      %p180 = scmp.le.s32.totalorder 1, %s14
      %p181 = scmp.lt.s32.totalorder %s14, 5
      %p182 = pnand %p180, %p181
      %p183 = pneg %p182
      // Predicated region
      $region25: #{tpu_custom_call.1} parent=5 // pred_check
        _
      $region26: #{tpu_custom_call.1} parent=5 // pred_check_branch
        %185 = sbr.rel (%p182) target = $region28
      $region27: #{tpu_custom_call.1} parent=5 // pred_region
        %s186 = ssub.s32 %s14, 1
        %s187 = sand.u32 %s57, 1
        %s188 = scalar_lea.sflag [#allocation5], %s187
        %s189 = sand.u32 %s57, 1
        %s190 = smul.addr %s189, 64
        %s191 = scalar_lea.vmem [#allocation4], %s190
        // Predicated region
        $region29: #{tpu_custom_call.1} parent=27 // pred_check
          %p192 = pneg %p70
        $region30: #{tpu_custom_call.1} parent=27 // pred_check_branch
          %194 = sbr.rel (%p192) target = $region32
        $region31: #{tpu_custom_call.1} parent=27 // pred_region
          %195 = dma.done %s188, 1024
        $region32: #{tpu_custom_call.1} parent=27 // pred_fallthru
          _
        %s196 = sand.u32 %s57, 1
        %s197 = scalar_lea.sflag [#allocation5], %s196
        %s198 = sand.u32 %s57, 1
        %s199 = smul.addr %s198, 64
        %s200 = scalar_lea.vmem [#allocation4], %s199
        %p201 = pneg %p70
        %p202 = pneg %p67
        %s203 = smul.u32 8, %s26
        %p204 = scmp.lt.s32.totalorder %s203, 7
        %s205 = scalar_select %p204, %s203, 7
        %s206 = smul.addr %s205, 8
        %s207 = scalar_lea.vmem %s1, %s206
        %p208 = pneg %p96
        %p209 = pneg %p93
        %p210 = pneg %p128
        %p211 = pneg %p125
        %s212 = sand.u32 %s115, 1
        %s213 = scalar_lea.sflag [#allocation6], %s212
        %s214 = sand.u32 %s115, 1
        %s215 = smul.addr %s214, 64
        %s216 = scalar_lea.vmem [#allocation7], %s215
        %s217 = smul.u32 8, %s26
        %s218 = smul.u32 8, %s26
        %p219 = scmp.lt.s32.totalorder %s218, 7
        %s220 = scalar_select %p219, %s218, 7
        %s221 = smul.addr %s220, 8
        %s222 = scalar_lea.vmem %s1, %s221
        %s223 = smul.u32 8, %s26
        %s224 = smul.u32 %s27, %s28
        %s225 = smul.u32 8, %s26
        %p226 = scmp.eq.s32.totalorder %s27, 0
        %p227 = scmp.eq.s32.totalorder %s28, 0
        %p228 = pnand %p226, %p227
        %p229 = pneg %p228
        // Predicated region
        $region33: #{tpu_custom_call.1} parent=27 // pred_check
          _
        $region34: #{tpu_custom_call.1} parent=27 // pred_check_branch
          %231 = sbr.rel (%p228) target = $region36
        $region35: #{tpu_custom_call.1} parent=27 // pred_region
          %vm232 = vcmask 7168
          %233 = vst.msk [vmem:[#allocation2] sm:$0xff] %vm232, 0.0
          %234 = vst.msk [vmem:[#allocation2 + $0x8] sm:$0xff] %vm232, 0.0
          %235 = vst.msk [vmem:[#allocation2 + $0x10] sm:$0xff] %vm232, 0.0
          %236 = vst.msk [vmem:[#allocation2 + $0x18] sm:$0xff] %vm232, 0.0
          %237 = vst.msk [vmem:[#allocation2 + $0x20] sm:$0xff] %vm232, 0.0
          %238 = vst.msk [vmem:[#allocation2 + $0x28] sm:$0xff] %vm232, 0.0
          %239 = vst.msk [vmem:[#allocation2 + $0x30] sm:$0xff] %vm232, 0.0
          %240 = vst.msk [vmem:[#allocation2 + $0x38] sm:$0xff] %vm232, 0.0
          %241 = vst.msk [vmem:[#allocation3] sm:$0xff] %vm232, 0.0
          %242 = vst.msk [vmem:[#allocation3 + $0x8] sm:$0xff] %vm232, 0.0
          %243 = vst.msk [vmem:[#allocation3 + $0x10] sm:$0xff] %vm232, 0.0
          %244 = vst.msk [vmem:[#allocation3 + $0x18] sm:$0xff] %vm232, 0.0
          %245 = vst.msk [vmem:[#allocation3 + $0x20] sm:$0xff] %vm232, 0.0
          %246 = vst.msk [vmem:[#allocation3 + $0x28] sm:$0xff] %vm232, 0.0
          %247 = vst.msk [vmem:[#allocation3 + $0x30] sm:$0xff] %vm232, 0.0
          %248 = vst.msk [vmem:[#allocation3 + $0x38] sm:$0xff] %vm232, 0.0
        $region36: #{tpu_custom_call.1} parent=27 // pred_fallthru
          _
        // Predicated region
        $region37: #{tpu_custom_call.1} parent=27 // pred_check
          %p249 = pneg %p226
        $region38: #{tpu_custom_call.1} parent=27 // pred_check_branch
          %251 = sbr.rel (%p249) target = $region40
        $region39: #{tpu_custom_call.1} parent=27 // pred_region
          %v252 = vld [vmem:[%s191] sm:$0xff]
          %v253 = vld [vmem:[%s191 + $0x8] sm:$0xff]
          %v254 = vld [vmem:[%s191 + $0x10] sm:$0xff]
          %v255 = vld [vmem:[%s191 + $0x18] sm:$0xff]
          %v256 = vld [vmem:[%s191 + $0x20] sm:$0xff]
          %v257 = vld [vmem:[%s191 + $0x28] sm:$0xff]
          %v258 = vld [vmem:[%s191 + $0x30] sm:$0xff]
          %v259 = vld [vmem:[%s191 + $0x38] sm:$0xff]
          %v260 = vld [vmem:[#allocation2] sm:$0xff]
          %v261 = vld [vmem:[#allocation2 + $0x8] sm:$0xff]
          %v262 = vld [vmem:[#allocation2 + $0x10] sm:$0xff]
          %v263 = vld [vmem:[#allocation2 + $0x18] sm:$0xff]
          %v264 = vld [vmem:[#allocation2 + $0x20] sm:$0xff]
          %v265 = vld [vmem:[#allocation2 + $0x28] sm:$0xff]
          %v266 = vld [vmem:[#allocation2 + $0x30] sm:$0xff]
          %v267 = vld [vmem:[#allocation2 + $0x38] sm:$0xff]
          %vm268 = vcmask 523264
          %v269 = vsel %vm268, %v252, 0.0
          %270 = vadd.xlane.f32.xlu0 %v269
          %v271 = vpop.xlane.xlu0 %270
          %v272 = vsel %vm268, %v253, 0.0
          %273 = vadd.xlane.f32.xlu0 %v272
          %v274 = vpop.xlane.xlu0 %273
          %v275 = vsel %vm268, %v254, 0.0
          %276 = vadd.xlane.f32.xlu0 %v275
          %v277 = vpop.xlane.xlu0 %276
          %v278 = vsel %vm268, %v255, 0.0
          %279 = vadd.xlane.f32.xlu0 %v278
          %v280 = vpop.xlane.xlu0 %279
          %v281 = vsel %vm268, %v256, 0.0
          %282 = vadd.xlane.f32.xlu0 %v281
          %v283 = vpop.xlane.xlu0 %282
          %v284 = vsel %vm268, %v257, 0.0
          %285 = vadd.xlane.f32.xlu0 %v284
          %v286 = vpop.xlane.xlu0 %285
          %v287 = vsel %vm268, %v258, 0.0
          %288 = vadd.xlane.f32.xlu0 %v287
          %v289 = vpop.xlane.xlu0 %288
          %v290 = vsel %vm268, %v259, 0.0
          %291 = vadd.xlane.f32.xlu0 %v290
          %v292 = vpop.xlane.xlu0 %291
          %v293 = vadd.f32 %v260, %v271
          %v294 = vadd.f32 %v261, %v274
          %v295 = vadd.f32 %v262, %v277
          %v296 = vadd.f32 %v263, %v280
          %v297 = vadd.f32 %v264, %v283
          %v298 = vadd.f32 %v265, %v286
          %v299 = vadd.f32 %v266, %v289
          %v300 = vadd.f32 %v267, %v292
          %vm301 = vcmask 7168
          %302 = vst.msk [vmem:[#allocation2] sm:$0xff] %vm301, %v293
          %303 = vst.msk [vmem:[#allocation2 + $0x8] sm:$0xff] %vm301, %v294
          %304 = vst.msk [vmem:[#allocation2 + $0x10] sm:$0xff] %vm301, %v295
          %305 = vst.msk [vmem:[#allocation2 + $0x18] sm:$0xff] %vm301, %v296
          %306 = vst.msk [vmem:[#allocation2 + $0x20] sm:$0xff] %vm301, %v297
          %307 = vst.msk [vmem:[#allocation2 + $0x28] sm:$0xff] %vm301, %v298
          %308 = vst.msk [vmem:[#allocation2 + $0x30] sm:$0xff] %vm301, %v299
          %309 = vst.msk [vmem:[#allocation2 + $0x38] sm:$0xff] %vm301, %v300
          %v310 = vld [vmem:[#allocation3] sm:$0xff]
          %v311 = vld [vmem:[#allocation3 + $0x8] sm:$0xff]
          %v312 = vld [vmem:[#allocation3 + $0x10] sm:$0xff]
          %v313 = vld [vmem:[#allocation3 + $0x18] sm:$0xff]
          %v314 = vld [vmem:[#allocation3 + $0x20] sm:$0xff]
          %v315 = vld [vmem:[#allocation3 + $0x28] sm:$0xff]
          %v316 = vld [vmem:[#allocation3 + $0x30] sm:$0xff]
          %v317 = vld [vmem:[#allocation3 + $0x38] sm:$0xff]
          %v318 = vmul.f32 %v252, %v252
          %v319 = vmul.f32 %v253, %v253
          %v320 = vmul.f32 %v254, %v254
          %v321 = vmul.f32 %v255, %v255
          %v322 = vmul.f32 %v256, %v256
          %v323 = vmul.f32 %v257, %v257
          %v324 = vmul.f32 %v258, %v258
          %v325 = vmul.f32 %v259, %v259
          %v326 = vsel %vm268, %v318, 0.0
          %327 = vadd.xlane.f32.xlu0 %v326
          %v328 = vpop.xlane.xlu0 %327
          %v329 = vsel %vm268, %v319, 0.0
          %330 = vadd.xlane.f32.xlu0 %v329
          %v331 = vpop.xlane.xlu0 %330
          %v332 = vsel %vm268, %v320, 0.0
          %333 = vadd.xlane.f32.xlu0 %v332
          %v334 = vpop.xlane.xlu0 %333
          %v335 = vsel %vm268, %v321, 0.0
          %336 = vadd.xlane.f32.xlu0 %v335
          %v337 = vpop.xlane.xlu0 %336
          %v338 = vsel %vm268, %v322, 0.0
          %339 = vadd.xlane.f32.xlu0 %v338
          %v340 = vpop.xlane.xlu0 %339
          %v341 = vsel %vm268, %v323, 0.0
          %342 = vadd.xlane.f32.xlu0 %v341
          %v343 = vpop.xlane.xlu0 %342
          %v344 = vsel %vm268, %v324, 0.0
          %345 = vadd.xlane.f32.xlu0 %v344
          %v346 = vpop.xlane.xlu0 %345
          %v347 = vsel %vm268, %v325, 0.0
          %348 = vadd.xlane.f32.xlu0 %v347
          %v349 = vpop.xlane.xlu0 %348
          %v350 = vadd.f32 %v310, %v328
          %v351 = vadd.f32 %v311, %v331
          %v352 = vadd.f32 %v312, %v334
          %v353 = vadd.f32 %v313, %v337
          %v354 = vadd.f32 %v314, %v340
          %v355 = vadd.f32 %v315, %v343
          %v356 = vadd.f32 %v316, %v346
          %v357 = vadd.f32 %v317, %v349
          %358 = vst.msk [vmem:[#allocation3] sm:$0xff] %vm301, %v350
          %359 = vst.msk [vmem:[#allocation3 + $0x8] sm:$0xff] %vm301, %v351
          %360 = vst.msk [vmem:[#allocation3 + $0x10] sm:$0xff] %vm301, %v352
          %361 = vst.msk [vmem:[#allocation3 + $0x18] sm:$0xff] %vm301, %v353
          %362 = vst.msk [vmem:[#allocation3 + $0x20] sm:$0xff] %vm301, %v354
          %363 = vst.msk [vmem:[#allocation3 + $0x28] sm:$0xff] %vm301, %v355
          %364 = vst.msk [vmem:[#allocation3 + $0x30] sm:$0xff] %vm301, %v356
          %365 = vst.msk [vmem:[#allocation3 + $0x38] sm:$0xff] %vm301, %v357
        $region40: #{tpu_custom_call.1} parent=27 // pred_fallthru
          _
        %p366 = scmp.eq.s32.totalorder %s27, 1
        %p367 = pnand %p366, %p227
        %p368 = pneg %p367
        // Predicated region
        $region41: #{tpu_custom_call.1} parent=27 // pred_check
          _
        $region42: #{tpu_custom_call.1} parent=27 // pred_check_branch
          %370 = sbr.rel (%p367) target = $region44
        $region43: #{tpu_custom_call.1} parent=27 // pred_region
          %v371 = vld [vmem:[#allocation2] sm:$0xff]
          %v372 = vld [vmem:[#allocation2 + $0x8] sm:$0xff]
          %v373 = vld [vmem:[#allocation2 + $0x10] sm:$0xff]
          %v374 = vld [vmem:[#allocation2 + $0x18] sm:$0xff]
          %v375 = vld [vmem:[#allocation2 + $0x20] sm:$0xff]
          %v376 = vld [vmem:[#allocation2 + $0x28] sm:$0xff]
          %v377 = vld [vmem:[#allocation2 + $0x30] sm:$0xff]
          %v378 = vld [vmem:[#allocation2 + $0x38] sm:$0xff]
          %v379 = vld [vmem:[#allocation3] sm:$0xff]
          %v380 = vld [vmem:[#allocation3 + $0x8] sm:$0xff]
          %v381 = vld [vmem:[#allocation3 + $0x10] sm:$0xff]
          %v382 = vld [vmem:[#allocation3 + $0x18] sm:$0xff]
          %v383 = vld [vmem:[#allocation3 + $0x20] sm:$0xff]
          %v384 = vld [vmem:[#allocation3 + $0x28] sm:$0xff]
          %v385 = vld [vmem:[#allocation3 + $0x30] sm:$0xff]
          %v386 = vld [vmem:[#allocation3 + $0x38] sm:$0xff]
          %v387 = vlaneseq
          %v388 = vshrl.u32 %v387, 7
          %v389 = vadd.s32 %v388, 8
          %v390 = vlaneseq
          %v391 = vand.u32 %v390, 127
          %v392 = vmul.u32 %v388, 4
          %v393 = vmul.u32 %v389, 4
          %vm394 = vcmp.ge.s32.totalorder %v391, %v392
          %vm395 = vcmp.ge.s32.totalorder %v391, %v393
          %v396 = vadd.s32 %v388, 1
          %v397 = vadd.s32 %v389, 1
          %v398 = vmul.u32 %v396, 4
          %v399 = vmul.u32 %v397, 4
          %vm400 = vcmp.lt.s32.totalorder %v391, %v398
          %vm401 = vcmp.lt.s32.totalorder %v391, %v399
          %vm402 = vmand %vm394, %vm400
          %vm403 = vmand %vm395, %vm401
          %v404 = vsel %vm402, 1, 0
          %v405 = vsel %vm403, 1, 0
          %v406 = vcvt.s32.f32 %v404
          %v407 = vcvt.s32.f32 %v405
          %v408 = vadd.s32 %v388, 16
          %v409 = vadd.s32 %v388, 24
          %v410 = vadd.s32 %v388, 32
          %v411 = vadd.s32 %v388, 40
          %v412 = vadd.s32 %v388, 48
          %v413 = vadd.s32 %v388, 56
          %v414 = vmul.u32 %v391, 4
          %vm415 = vcmp.ge.s32.totalorder %v388, %v414
          %vm416 = vcmp.ge.s32.totalorder %v389, %v414
          %vm417 = vcmp.ge.s32.totalorder %v408, %v414
          %vm418 = vcmp.ge.s32.totalorder %v409, %v414
          %vm419 = vcmp.ge.s32.totalorder %v410, %v414
          %vm420 = vcmp.ge.s32.totalorder %v411, %v414
          %vm421 = vcmp.ge.s32.totalorder %v412, %v414
          %vm422 = vcmp.ge.s32.totalorder %v413, %v414
          %v423 = vadd.s32 %v391, 1
          %v424 = vmul.u32 %v423, 4
          %vm425 = vcmp.lt.s32.totalorder %v388, %v424
          %vm426 = vcmp.lt.s32.totalorder %v389, %v424
          %vm427 = vcmp.lt.s32.totalorder %v408, %v424
          %vm428 = vcmp.lt.s32.totalorder %v409, %v424
          %vm429 = vcmp.lt.s32.totalorder %v410, %v424
          %vm430 = vcmp.lt.s32.totalorder %v411, %v424
          %vm431 = vcmp.lt.s32.totalorder %v412, %v424
          %vm432 = vcmp.lt.s32.totalorder %v413, %v424
          %vm433 = vmand %vm415, %vm425
          %vm434 = vmand %vm416, %vm426
          %vm435 = vmand %vm417, %vm427
          %vm436 = vmand %vm418, %vm428
          %vm437 = vmand %vm419, %vm429
          %vm438 = vmand %vm420, %vm430
          %vm439 = vmand %vm421, %vm431
          %vm440 = vmand %vm422, %vm432
          %v441 = vsel %vm433, 1, 0
          %v442 = vsel %vm434, 1, 0
          %v443 = vsel %vm435, 1, 0
          %v444 = vsel %vm436, 1, 0
          %v445 = vsel %vm437, 1, 0
          %v446 = vsel %vm438, 1, 0
          %v447 = vsel %vm439, 1, 0
          %v448 = vsel %vm440, 1, 0
          %v449 = vcvt.s32.f32 %v441
          %v450 = vcvt.s32.f32 %v442
          %v451 = vcvt.s32.f32 %v443
          %v452 = vcvt.s32.f32 %v444
          %v453 = vcvt.s32.f32 %v445
          %v454 = vcvt.s32.f32 %v446
          %v455 = vcvt.s32.f32 %v447
          %v456 = vcvt.s32.f32 %v448
          %vm457 = vcmask 523264
          %v459 = vsel %vm457, %v406, 0
          %v462 = vsel %vm457, %v407, 0
          %464 = vmatprep.subr.mxu0 0.0
          %465 = vmatpush1.msra.mxu0 %v371
          %466 = vmatprep.subr.mxu0 0.0
          %467 = vmatpush1.msra.mxu0 %v372
          %468 = vmatprep.subr.mxu0 0.0
          %469 = vmatpush1.msra.mxu0 %v373
          %470 = vmatprep.subr.mxu0 0.0
          %471 = vmatpush1.msra.mxu0 %v374
          %472 = vmatprep.subr.mxu0 0.0
          %473 = vmatpush1.msra.mxu0 %v375
          %474 = vmatprep.subr.mxu0 0.0
          %475 = vmatpush1.msra.mxu0 %v376
          %476 = vmatprep.subr.mxu0 0.0
          %477 = vmatpush1.msra.mxu0 %v377
          %478 = vmatprep.subr.mxu0 0.0
          %479 = vmatpush1.msra.mxu0 %v378
          %480 = vmatprep.subr.mxu0 0.0
          %481 = vmatpush1.msra.mxu0 0.0
          %482 = vmatprep.subr.mxu0 0.0
          %483 = vmatpush1.msra.mxu0 0.0
          %484 = vmatprep.subr.mxu0 0.0
          %485 = vmatpush1.msra.mxu0 0.0
          %486 = vmatprep.subr.mxu0 0.0
          %487 = vmatpush1.msra.mxu0 0.0
          %488 = vmatprep.subr.mxu0 0.0
          %489 = vmatpush1.msra.mxu0 0.0
          %490 = vmatprep.subr.mxu0 0.0
          %491 = vmatpush1.msra.mxu0 0.0
          %492 = vmatprep.subr.mxu0 0.0
          %493 = vmatpush1.msra.mxu0 0.0
          %494 = vmatprep.subr.mxu0 0.0
          %495 = vmatpush1.msra.mxu0 0.0
          %496 = vmatprep.subr.mxu0 0.0
          %497 = vmatpush1.msra.mxu0 0.0
          %498 = vmatprep.subr.mxu0 0.0
          %499 = vmatpush1.msra.mxu0 0.0
          %500 = vmatprep.subr.mxu0 0.0
          %501 = vmatpush1.msra.mxu0 0.0
          %502 = vmatprep.subr.mxu0 0.0
          %503 = vmatpush1.msra.mxu0 0.0
          %504 = vmatprep.subr.mxu0 0.0
          %505 = vmatpush1.msra.mxu0 0.0
          %506 = vmatprep.subr.mxu0 0.0
          %507 = vmatpush1.msra.mxu0 0.0
          %508 = vmatprep.subr.mxu0 0.0
          %509 = vmatpush1.msra.mxu0 0.0
          %510 = vmatprep.subr.mxu0 0.0
          %511 = vmatpush1.msra.mxu0 0.0
          %512 = vmatprep.subr.mxu0 0.0
          %513 = vmatpush1.msra.mxu0 0.0
          %514 = vmatprep.subr.mxu0 0.0
          %515 = vmatpush1.msra.mxu0 0.0
          %516 = vmatprep.subr.mxu0 0.0
          %517 = vmatpush1.msra.mxu0 0.0
          %518 = vmatprep.subr.mxu0 0.0
          %519 = vmatpush1.msra.mxu0 0.0
          %520 = vmatprep.subr.mxu0 0.0
          %521 = vmatpush1.msra.mxu0 0.0
          %522 = vmatprep.subr.mxu0 0.0
          %523 = vmatpush1.msra.mxu0 0.0
          %524 = vmatprep.subr.mxu0 0.0
          %525 = vmatpush1.msra.mxu0 0.0
          %526 = vmatprep.subr.mxu0 0.0
          %527 = vmatpush1.msra.mxu0 0.0
          %528 = vmatprep.mubr.f32.mxu0 0.0
          %529 = vmatmul.mubr.f32.gmra.mrb[0].mxu0 %v459
          %v530 = vpop.f32.mrb[0].mxu0
          %v531 = vadd.f32 0.0, %v530
          %v532 = vpop.f32.mrb[0].mxu0
          %533 = vmatprep.mubr.f32.mxu0 0.0
          %534 = vmatmul.mubr.f32.gmra.mrb[0].mxu0 %v462
          %v535 = vpop.f32.mrb[0].mxu0
          %v536 = vadd.f32 0.0, %v535
          %v537 = vpop.f32.mrb[0].mxu0
          %538 = vdwg.mxu0
          %539 = vmatprep.subr.mxu0 0.0
          %540 = vmatpush1.msra.mxu0 %v379
          %541 = vmatprep.subr.mxu0 0.0
          %542 = vmatpush1.msra.mxu0 %v380
          %543 = vmatprep.subr.mxu0 0.0
          %544 = vmatpush1.msra.mxu0 %v381
          %545 = vmatprep.subr.mxu0 0.0
          %546 = vmatpush1.msra.mxu0 %v382
          %547 = vmatprep.subr.mxu0 0.0
          %548 = vmatpush1.msra.mxu0 %v383
          %549 = vmatprep.subr.mxu0 0.0
          %550 = vmatpush1.msra.mxu0 %v384
          %551 = vmatprep.subr.mxu0 0.0
          %552 = vmatpush1.msra.mxu0 %v385
          %553 = vmatprep.subr.mxu0 0.0
          %554 = vmatpush1.msra.mxu0 %v386
          %555 = vmatprep.subr.mxu0 0.0
          %556 = vmatpush1.msra.mxu0 0.0
          %557 = vmatprep.subr.mxu0 0.0
          %558 = vmatpush1.msra.mxu0 0.0
          %559 = vmatprep.subr.mxu0 0.0
          %560 = vmatpush1.msra.mxu0 0.0
          %561 = vmatprep.subr.mxu0 0.0
          %562 = vmatpush1.msra.mxu0 0.0
          %563 = vmatprep.subr.mxu0 0.0
          %564 = vmatpush1.msra.mxu0 0.0
          %565 = vmatprep.subr.mxu0 0.0
          %566 = vmatpush1.msra.mxu0 0.0
          %567 = vmatprep.subr.mxu0 0.0
          %568 = vmatpush1.msra.mxu0 0.0
          %569 = vmatprep.subr.mxu0 0.0
          %570 = vmatpush1.msra.mxu0 0.0
          %571 = vmatprep.subr.mxu0 0.0
          %572 = vmatpush1.msra.mxu0 0.0
          %573 = vmatprep.subr.mxu0 0.0
          %574 = vmatpush1.msra.mxu0 0.0
          %575 = vmatprep.subr.mxu0 0.0
          %576 = vmatpush1.msra.mxu0 0.0
          %577 = vmatprep.subr.mxu0 0.0
          %578 = vmatpush1.msra.mxu0 0.0
          %579 = vmatprep.subr.mxu0 0.0
          %580 = vmatpush1.msra.mxu0 0.0
          %581 = vmatprep.subr.mxu0 0.0
          %582 = vmatpush1.msra.mxu0 0.0
          %583 = vmatprep.subr.mxu0 0.0
          %584 = vmatpush1.msra.mxu0 0.0
          %585 = vmatprep.subr.mxu0 0.0
          %586 = vmatpush1.msra.mxu0 0.0
          %587 = vmatprep.subr.mxu0 0.0
          %588 = vmatpush1.msra.mxu0 0.0
          %589 = vmatprep.subr.mxu0 0.0
          %590 = vmatpush1.msra.mxu0 0.0
          %591 = vmatprep.subr.mxu0 0.0
          %592 = vmatpush1.msra.mxu0 0.0
          %593 = vmatprep.subr.mxu0 0.0
          %594 = vmatpush1.msra.mxu0 0.0
          %595 = vmatprep.subr.mxu0 0.0
          %596 = vmatpush1.msra.mxu0 0.0
          %597 = vmatprep.subr.mxu0 0.0
          %598 = vmatpush1.msra.mxu0 0.0
          %599 = vmatprep.subr.mxu0 0.0
          %600 = vmatpush1.msra.mxu0 0.0
          %601 = vmatprep.subr.mxu0 0.0
          %602 = vmatpush1.msra.mxu0 0.0
          %603 = vmatprep.mubr.f32.mxu0 0.0
          %604 = vmatmul.mubr.f32.gmra.mrb[0].mxu0 %v459
          %v605 = vpop.f32.mrb[0].mxu0
          %v606 = vadd.f32 0.0, %v605
          %v607 = vpop.f32.mrb[0].mxu0
          %608 = vmatprep.mubr.f32.mxu0 0.0
          %609 = vmatmul.mubr.f32.gmra.mrb[0].mxu0 %v462
          %v610 = vpop.f32.mrb[0].mxu0
          %v611 = vadd.f32 0.0, %v610
          %v612 = vpop.f32.mrb[0].mxu0
          %613 = vdwg.mxu0
          %v614 = vmul.f32 %v531, 0.00390625
          %v615 = vmul.f32 %v536, 0.00390625
          %v616 = vmul.f32 %v606, 0.00390625
          %v617 = vmul.f32 %v611, 0.00390625
          %v618 = vmul.f32 %v614, %v614
          %v619 = vmul.f32 %v615, %v615
          %v620 = vsub.f32 %v616, %v618
          %v621 = vsub.f32 %v617, %v619
          %v622 = vmax.f32 %v620, 0.0
          %v623 = vmax.f32 %v621, 0.0
          %v624 = vadd.f32 %v622, 1e-05
          %v625 = vadd.f32 %v623, 1e-05
          %v626 = vrsqrt.pop %v624
          %v627 = vrsqrt.pop %v625
          %vm628 = vcmask 130048
          %v630 = vsel %vm628, %v449, 0
          %v633 = vsel %vm628, %v450, 0
          %v636 = vsel %vm628, %v451, 0
          %v639 = vsel %vm628, %v452, 0
          %v642 = vsel %vm628, %v453, 0
          %v645 = vsel %vm628, %v454, 0
          %v648 = vsel %vm628, %v455, 0
          %v651 = vsel %vm628, %v456, 0
          %653 = vmatprep.subr.mxu0 0.0
          %654 = vmatpush1.msra.mxu0 %v614
          %655 = vmatprep.subr.mxu0 0.0
          %656 = vmatpush1.msra.mxu0 %v615
          %657 = vmatprep.subr.mxu0 0.0
          %658 = vmatpush1.msra.mxu0 0.0
          %659 = vmatprep.subr.mxu0 0.0
          %660 = vmatpush1.msra.mxu0 0.0
          %661 = vmatprep.subr.mxu0 0.0
          %662 = vmatpush1.msra.mxu0 0.0
          %663 = vmatprep.subr.mxu0 0.0
          %664 = vmatpush1.msra.mxu0 0.0
          %665 = vmatprep.subr.mxu0 0.0
          %666 = vmatpush1.msra.mxu0 0.0
          %667 = vmatprep.subr.mxu0 0.0
          %668 = vmatpush1.msra.mxu0 0.0
          %669 = vmatprep.subr.mxu0 0.0
          %670 = vmatpush1.msra.mxu0 0.0
          %671 = vmatprep.subr.mxu0 0.0
          %672 = vmatpush1.msra.mxu0 0.0
          %673 = vmatprep.subr.mxu0 0.0
          %674 = vmatpush1.msra.mxu0 0.0
          %675 = vmatprep.subr.mxu0 0.0
          %676 = vmatpush1.msra.mxu0 0.0
          %677 = vmatprep.subr.mxu0 0.0
          %678 = vmatpush1.msra.mxu0 0.0
          %679 = vmatprep.subr.mxu0 0.0
          %680 = vmatpush1.msra.mxu0 0.0
          %681 = vmatprep.subr.mxu0 0.0
          %682 = vmatpush1.msra.mxu0 0.0
          %683 = vmatprep.subr.mxu0 0.0
          %684 = vmatpush1.msra.mxu0 0.0
          %685 = vmatprep.subr.mxu0 0.0
          %686 = vmatpush1.msra.mxu0 0.0
          %687 = vmatprep.subr.mxu0 0.0
          %688 = vmatpush1.msra.mxu0 0.0
          %689 = vmatprep.subr.mxu0 0.0
          %690 = vmatpush1.msra.mxu0 0.0
          %691 = vmatprep.subr.mxu0 0.0
          %692 = vmatpush1.msra.mxu0 0.0
          %693 = vmatprep.subr.mxu0 0.0
          %694 = vmatpush1.msra.mxu0 0.0
          %695 = vmatprep.subr.mxu0 0.0
          %696 = vmatpush1.msra.mxu0 0.0
          %697 = vmatprep.subr.mxu0 0.0
          %698 = vmatpush1.msra.mxu0 0.0
          %699 = vmatprep.subr.mxu0 0.0
          %700 = vmatpush1.msra.mxu0 0.0
          %701 = vmatprep.subr.mxu0 0.0
          %702 = vmatpush1.msra.mxu0 0.0
          %703 = vmatprep.subr.mxu0 0.0
          %704 = vmatpush1.msra.mxu0 0.0
          %705 = vmatprep.subr.mxu0 0.0
          %706 = vmatpush1.msra.mxu0 0.0
          %707 = vmatprep.subr.mxu0 0.0
          %708 = vmatpush1.msra.mxu0 0.0
          %709 = vmatprep.subr.mxu0 0.0
          %710 = vmatpush1.msra.mxu0 0.0
          %711 = vmatprep.subr.mxu0 0.0
          %712 = vmatpush1.msra.mxu0 0.0
          %713 = vmatprep.subr.mxu0 0.0
          %714 = vmatpush1.msra.mxu0 0.0
          %715 = vmatprep.subr.mxu0 0.0
          %716 = vmatpush1.msra.mxu0 0.0
          %717 = vmatprep.mubr.f32.mxu0 0.0
          %718 = vmatmul.mubr.f32.gmra.mrb[0].mxu0 %v630
          %v719 = vpop.f32.mrb[0].mxu0
          %v720 = vadd.f32 0.0, %v719
          %v721 = vpop.f32.mrb[0].mxu0
          %722 = vmatprep.mubr.f32.mxu0 0.0
          %723 = vmatmul.mubr.f32.gmra.mrb[0].mxu0 %v633
          %v724 = vpop.f32.mrb[0].mxu0
          %v725 = vadd.f32 0.0, %v724
          %v726 = vpop.f32.mrb[0].mxu0
          %727 = vmatprep.mubr.f32.mxu0 0.0
          %728 = vmatmul.mubr.f32.gmra.mrb[0].mxu0 %v636
          %v729 = vpop.f32.mrb[0].mxu0
          %v730 = vadd.f32 0.0, %v729
          %v731 = vpop.f32.mrb[0].mxu0
          %732 = vmatprep.mubr.f32.mxu0 0.0
          %733 = vmatmul.mubr.f32.gmra.mrb[0].mxu0 %v639
          %v734 = vpop.f32.mrb[0].mxu0
          %v735 = vadd.f32 0.0, %v734
          %v736 = vpop.f32.mrb[0].mxu0
          %737 = vmatprep.mubr.f32.mxu0 0.0
          %738 = vmatmul.mubr.f32.gmra.mrb[0].mxu0 %v642
          %v739 = vpop.f32.mrb[0].mxu0
          %v740 = vadd.f32 0.0, %v739
          %v741 = vpop.f32.mrb[0].mxu0
          %742 = vmatprep.mubr.f32.mxu0 0.0
          %743 = vmatmul.mubr.f32.gmra.mrb[0].mxu0 %v645
          %v744 = vpop.f32.mrb[0].mxu0
          %v745 = vadd.f32 0.0, %v744
          %v746 = vpop.f32.mrb[0].mxu0
          %747 = vmatprep.mubr.f32.mxu0 0.0
          %748 = vmatmul.mubr.f32.gmra.mrb[0].mxu0 %v648
          %v749 = vpop.f32.mrb[0].mxu0
          %v750 = vadd.f32 0.0, %v749
          %v751 = vpop.f32.mrb[0].mxu0
          %752 = vmatprep.mubr.f32.mxu0 0.0
          %753 = vmatmul.mubr.f32.gmra.mrb[0].mxu0 %v651
          %v754 = vpop.f32.mrb[0].mxu0
          %v755 = vadd.f32 0.0, %v754
          %v756 = vpop.f32.mrb[0].mxu0
          %757 = vdwg.mxu0
          %758 = vmatprep.subr.mxu0 0.0
          %759 = vmatpush1.msra.mxu0 %v626
          %760 = vmatprep.subr.mxu0 0.0
          %761 = vmatpush1.msra.mxu0 %v627
          %762 = vmatprep.subr.mxu0 0.0
          %763 = vmatpush1.msra.mxu0 0.0
          %764 = vmatprep.subr.mxu0 0.0
          %765 = vmatpush1.msra.mxu0 0.0
          %766 = vmatprep.subr.mxu0 0.0
          %767 = vmatpush1.msra.mxu0 0.0
          %768 = vmatprep.subr.mxu0 0.0
          %769 = vmatpush1.msra.mxu0 0.0
          %770 = vmatprep.subr.mxu0 0.0
          %771 = vmatpush1.msra.mxu0 0.0
          %772 = vmatprep.subr.mxu0 0.0
          %773 = vmatpush1.msra.mxu0 0.0
          %774 = vmatprep.subr.mxu0 0.0
          %775 = vmatpush1.msra.mxu0 0.0
          %776 = vmatprep.subr.mxu0 0.0
          %777 = vmatpush1.msra.mxu0 0.0
          %778 = vmatprep.subr.mxu0 0.0
          %779 = vmatpush1.msra.mxu0 0.0
          %780 = vmatprep.subr.mxu0 0.0
          %781 = vmatpush1.msra.mxu0 0.0
          %782 = vmatprep.subr.mxu0 0.0
          %783 = vmatpush1.msra.mxu0 0.0
          %784 = vmatprep.subr.mxu0 0.0
          %785 = vmatpush1.msra.mxu0 0.0
          %786 = vmatprep.subr.mxu0 0.0
          %787 = vmatpush1.msra.mxu0 0.0
          %788 = vmatprep.subr.mxu0 0.0
          %789 = vmatpush1.msra.mxu0 0.0
          %790 = vmatprep.subr.mxu0 0.0
          %791 = vmatpush1.msra.mxu0 0.0
          %792 = vmatprep.subr.mxu0 0.0
          %793 = vmatpush1.msra.mxu0 0.0
          %794 = vmatprep.subr.mxu0 0.0
          %795 = vmatpush1.msra.mxu0 0.0
          %796 = vmatprep.subr.mxu0 0.0
          %797 = vmatpush1.msra.mxu0 0.0
          %798 = vmatprep.subr.mxu0 0.0
          %799 = vmatpush1.msra.mxu0 0.0
          %800 = vmatprep.subr.mxu0 0.0
          %801 = vmatpush1.msra.mxu0 0.0
          %802 = vmatprep.subr.mxu0 0.0
          %803 = vmatpush1.msra.mxu0 0.0
          %804 = vmatprep.subr.mxu0 0.0
          %805 = vmatpush1.msra.mxu0 0.0
          %806 = vmatprep.subr.mxu0 0.0
          %807 = vmatpush1.msra.mxu0 0.0
          %808 = vmatprep.subr.mxu0 0.0
          %809 = vmatpush1.msra.mxu0 0.0
          %810 = vmatprep.subr.mxu0 0.0
          %811 = vmatpush1.msra.mxu0 0.0
          %812 = vmatprep.subr.mxu0 0.0
          %813 = vmatpush1.msra.mxu0 0.0
          %814 = vmatprep.subr.mxu0 0.0
          %815 = vmatpush1.msra.mxu0 0.0
          %816 = vmatprep.subr.mxu0 0.0
          %817 = vmatpush1.msra.mxu0 0.0
          %818 = vmatprep.subr.mxu0 0.0
          %819 = vmatpush1.msra.mxu0 0.0
          %820 = vmatprep.subr.mxu0 0.0
          %821 = vmatpush1.msra.mxu0 0.0
          %822 = vmatprep.mubr.f32.mxu0 0.0
          %823 = vmatmul.mubr.f32.gmra.mrb[0].mxu0 %v630
          %v824 = vpop.f32.mrb[0].mxu0
          %v825 = vadd.f32 0.0, %v824
          %v826 = vpop.f32.mrb[0].mxu0
          %827 = vmatprep.mubr.f32.mxu0 0.0
          %828 = vmatmul.mubr.f32.gmra.mrb[0].mxu0 %v633
          %v829 = vpop.f32.mrb[0].mxu0
          %v830 = vadd.f32 0.0, %v829
          %v831 = vpop.f32.mrb[0].mxu0
          %832 = vmatprep.mubr.f32.mxu0 0.0
          %833 = vmatmul.mubr.f32.gmra.mrb[0].mxu0 %v636
          %v834 = vpop.f32.mrb[0].mxu0
          %v835 = vadd.f32 0.0, %v834
          %v836 = vpop.f32.mrb[0].mxu0
          %837 = vmatprep.mubr.f32.mxu0 0.0
          %838 = vmatmul.mubr.f32.gmra.mrb[0].mxu0 %v639
          %v839 = vpop.f32.mrb[0].mxu0
          %v840 = vadd.f32 0.0, %v839
          %v841 = vpop.f32.mrb[0].mxu0
          %842 = vmatprep.mubr.f32.mxu0 0.0
          %843 = vmatmul.mubr.f32.gmra.mrb[0].mxu0 %v642
          %v844 = vpop.f32.mrb[0].mxu0
          %v845 = vadd.f32 0.0, %v844
          %v846 = vpop.f32.mrb[0].mxu0
          %847 = vmatprep.mubr.f32.mxu0 0.0
          %848 = vmatmul.mubr.f32.gmra.mrb[0].mxu0 %v645
          %v849 = vpop.f32.mrb[0].mxu0
          %v850 = vadd.f32 0.0, %v849
          %v851 = vpop.f32.mrb[0].mxu0
          %852 = vmatprep.mubr.f32.mxu0 0.0
          %853 = vmatmul.mubr.f32.gmra.mrb[0].mxu0 %v648
          %v854 = vpop.f32.mrb[0].mxu0
          %v855 = vadd.f32 0.0, %v854
          %v856 = vpop.f32.mrb[0].mxu0
          %857 = vmatprep.mubr.f32.mxu0 0.0
          %858 = vmatmul.mubr.f32.gmra.mrb[0].mxu0 %v651
          %v859 = vpop.f32.mrb[0].mxu0
          %v860 = vadd.f32 0.0, %v859
          %v861 = vpop.f32.mrb[0].mxu0
          %862 = vdwg.mxu0
          %v863 = vld [vmem:[%s222] sm:$0xff]
          %v864 = vld [vmem:[%s222 + $0x8] sm:$0xff]
          %v865 = vld [vmem:[%s222 + $0x10] sm:$0xff]
          %v866 = vld [vmem:[%s222 + $0x18] sm:$0xff]
          %v867 = vld [vmem:[%s222 + $0x20] sm:$0xff]
          %v868 = vld [vmem:[%s222 + $0x28] sm:$0xff]
          %v869 = vld [vmem:[%s222 + $0x30] sm:$0xff]
          %v870 = vld [vmem:[%s222 + $0x38] sm:$0xff]
          %v871 = vmul.f32 %v825, %v863
          %v872 = vmul.f32 %v830, %v864
          %v873 = vmul.f32 %v835, %v865
          %v874 = vmul.f32 %v840, %v866
          %v875 = vmul.f32 %v845, %v867
          %v876 = vmul.f32 %v850, %v868
          %v877 = vmul.f32 %v855, %v869
          %v878 = vmul.f32 %v860, %v870
          %v879 = vmul.f32 %v720, %v871
          %v880 = vmul.f32 %v725, %v872
          %v881 = vmul.f32 %v730, %v873
          %v882 = vmul.f32 %v735, %v874
          %v883 = vmul.f32 %v740, %v875
          %v884 = vmul.f32 %v745, %v876
          %v885 = vmul.f32 %v750, %v877
          %v886 = vmul.f32 %v755, %v878
          %895 = vrot.lane.b32.xlu0 %v879, 1
          %v896 = vpop.permute.xlu0 %895
          %897 = vrot.lane.b32.xlu0 %v880, 1
          %v898 = vpop.permute.xlu0 %897
          %899 = vrot.lane.b32.xlu0 %v881, 1
          %v900 = vpop.permute.xlu0 %899
          %901 = vrot.lane.b32.xlu0 %v882, 1
          %v902 = vpop.permute.xlu0 %901
          %903 = vrot.lane.b32.xlu0 %v883, 1
          %v904 = vpop.permute.xlu0 %903
          %905 = vrot.lane.b32.xlu0 %v884, 1
          %v906 = vpop.permute.xlu0 %905
          %907 = vrot.lane.b32.xlu0 %v885, 1
          %v908 = vpop.permute.xlu0 %907
          %909 = vrot.lane.b32.xlu0 %v886, 1
          %v910 = vpop.permute.xlu0 %909
          %v919 = vsub.f32 %v863, %v896
          %v920 = vsub.f32 %v864, %v898
          %v921 = vsub.f32 %v865, %v900
          %v922 = vsub.f32 %v866, %v902
          %v923 = vsub.f32 %v867, %v904
          %v924 = vsub.f32 %v868, %v906
          %v925 = vsub.f32 %v869, %v908
          %v926 = vsub.f32 %v870, %v910
          %vm927 = vcmask 7168
          %928 = vst.msk [vmem:[#allocation2] sm:$0xff] %vm927, %v871
          %929 = vst.msk [vmem:[#allocation2 + $0x8] sm:$0xff] %vm927, %v872
          %930 = vst.msk [vmem:[#allocation2 + $0x10] sm:$0xff] %vm927, %v873
          %931 = vst.msk [vmem:[#allocation2 + $0x18] sm:$0xff] %vm927, %v874
          %932 = vst.msk [vmem:[#allocation2 + $0x20] sm:$0xff] %vm927, %v875
          %933 = vst.msk [vmem:[#allocation2 + $0x28] sm:$0xff] %vm927, %v876
          %934 = vst.msk [vmem:[#allocation2 + $0x30] sm:$0xff] %vm927, %v877
          %935 = vst.msk [vmem:[#allocation2 + $0x38] sm:$0xff] %vm927, %v878
          %944 = vrot.lane.b32.xlu0 %v919, 127
          %v945 = vpop.permute.xlu0 %944
          %946 = vrot.lane.b32.xlu0 %v920, 127
          %v947 = vpop.permute.xlu0 %946
          %948 = vrot.lane.b32.xlu0 %v921, 127
          %v949 = vpop.permute.xlu0 %948
          %950 = vrot.lane.b32.xlu0 %v922, 127
          %v951 = vpop.permute.xlu0 %950
          %952 = vrot.lane.b32.xlu0 %v923, 127
          %v953 = vpop.permute.xlu0 %952
          %954 = vrot.lane.b32.xlu0 %v924, 127
          %v955 = vpop.permute.xlu0 %954
          %956 = vrot.lane.b32.xlu0 %v925, 127
          %v957 = vpop.permute.xlu0 %956
          %958 = vrot.lane.b32.xlu0 %v926, 127
          %v959 = vpop.permute.xlu0 %958
          %968 = vst.msk [vmem:[#allocation3] sm:$0xff] %vm927, %v945
          %969 = vst.msk [vmem:[#allocation3 + $0x8] sm:$0xff] %vm927, %v947
          %970 = vst.msk [vmem:[#allocation3 + $0x10] sm:$0xff] %vm927, %v949
          %971 = vst.msk [vmem:[#allocation3 + $0x18] sm:$0xff] %vm927, %v951
          %972 = vst.msk [vmem:[#allocation3 + $0x20] sm:$0xff] %vm927, %v953
          %973 = vst.msk [vmem:[#allocation3 + $0x28] sm:$0xff] %vm927, %v955
          %974 = vst.msk [vmem:[#allocation3 + $0x30] sm:$0xff] %vm927, %v957
          %975 = vst.msk [vmem:[#allocation3 + $0x38] sm:$0xff] %vm927, %v959
        $region44: #{tpu_custom_call.1} parent=27 // pred_fallthru
          _
        // Predicated region
        $region45: #{tpu_custom_call.1} parent=27 // pred_check
          %p976 = pneg %p366
        $region46: #{tpu_custom_call.1} parent=27 // pred_check_branch
          %978 = sbr.rel (%p976) target = $region48
        $region47: #{tpu_custom_call.1} parent=27 // pred_region
          %v979 = vld [vmem:[%s191] sm:$0xff]
          %v980 = vld [vmem:[%s191 + $0x8] sm:$0xff]
          %v981 = vld [vmem:[%s191 + $0x10] sm:$0xff]
          %v982 = vld [vmem:[%s191 + $0x18] sm:$0xff]
          %v983 = vld [vmem:[%s191 + $0x20] sm:$0xff]
          %v984 = vld [vmem:[%s191 + $0x28] sm:$0xff]
          %v985 = vld [vmem:[%s191 + $0x30] sm:$0xff]
          %v986 = vld [vmem:[%s191 + $0x38] sm:$0xff]
          %v987 = vld [vmem:[#allocation2] sm:$0xff]
          %v988 = vld [vmem:[#allocation2 + $0x8] sm:$0xff]
          %v989 = vld [vmem:[#allocation2 + $0x10] sm:$0xff]
          %v990 = vld [vmem:[#allocation2 + $0x18] sm:$0xff]
          %v991 = vld [vmem:[#allocation2 + $0x20] sm:$0xff]
          %v992 = vld [vmem:[#allocation2 + $0x28] sm:$0xff]
          %v993 = vld [vmem:[#allocation2 + $0x30] sm:$0xff]
          %v994 = vld [vmem:[#allocation2 + $0x38] sm:$0xff]
          %996 = vset.pattern.permute.xlu0 0
          %997 = vperm.xlu0 %996, %v987
          %v998 = vpop.permute.xlu0 %997
          %1001 = vset.pattern.permute.xlu0 0
          %1002 = vperm.xlu0 %1001, %v988
          %v1003 = vpop.permute.xlu0 %1002
          %1006 = vset.pattern.permute.xlu0 0
          %1007 = vperm.xlu0 %1006, %v989
          %v1008 = vpop.permute.xlu0 %1007
          %1011 = vset.pattern.permute.xlu0 0
          %1012 = vperm.xlu0 %1011, %v990
          %v1013 = vpop.permute.xlu0 %1012
          %1016 = vset.pattern.permute.xlu0 0
          %1017 = vperm.xlu0 %1016, %v991
          %v1018 = vpop.permute.xlu0 %1017
          %1021 = vset.pattern.permute.xlu0 0
          %1022 = vperm.xlu0 %1021, %v992
          %v1023 = vpop.permute.xlu0 %1022
          %1026 = vset.pattern.permute.xlu0 0
          %1027 = vperm.xlu0 %1026, %v993
          %v1028 = vpop.permute.xlu0 %1027
          %1031 = vset.pattern.permute.xlu0 0
          %1032 = vperm.xlu0 %1031, %v994
          %v1033 = vpop.permute.xlu0 %1032
          %v1035 = vmul.f32 %v979, %v998
          %v1036 = vmul.f32 %v980, %v1003
          %v1037 = vmul.f32 %v981, %v1008
          %v1038 = vmul.f32 %v982, %v1013
          %v1039 = vmul.f32 %v983, %v1018
          %v1040 = vmul.f32 %v984, %v1023
          %v1041 = vmul.f32 %v985, %v1028
          %v1042 = vmul.f32 %v986, %v1033
          %v1043 = vld [vmem:[#allocation3] sm:$0xff]
          %v1044 = vld [vmem:[#allocation3 + $0x8] sm:$0xff]
          %v1045 = vld [vmem:[#allocation3 + $0x10] sm:$0xff]
          %v1046 = vld [vmem:[#allocation3 + $0x18] sm:$0xff]
          %v1047 = vld [vmem:[#allocation3 + $0x20] sm:$0xff]
          %v1048 = vld [vmem:[#allocation3 + $0x28] sm:$0xff]
          %v1049 = vld [vmem:[#allocation3 + $0x30] sm:$0xff]
          %v1050 = vld [vmem:[#allocation3 + $0x38] sm:$0xff]
          %1052 = vset.pattern.permute.xlu0 0
          %1053 = vperm.xlu0 %1052, %v1043
          %v1054 = vpop.permute.xlu0 %1053
          %1057 = vset.pattern.permute.xlu0 0
          %1058 = vperm.xlu0 %1057, %v1044
          %v1059 = vpop.permute.xlu0 %1058
          %1062 = vset.pattern.permute.xlu0 0
          %1063 = vperm.xlu0 %1062, %v1045
          %v1064 = vpop.permute.xlu0 %1063
          %1067 = vset.pattern.permute.xlu0 0
          %1068 = vperm.xlu0 %1067, %v1046
          %v1069 = vpop.permute.xlu0 %1068
          %1072 = vset.pattern.permute.xlu0 0
          %1073 = vperm.xlu0 %1072, %v1047
          %v1074 = vpop.permute.xlu0 %1073
          %1077 = vset.pattern.permute.xlu0 0
          %1078 = vperm.xlu0 %1077, %v1048
          %v1079 = vpop.permute.xlu0 %1078
          %1082 = vset.pattern.permute.xlu0 0
          %1083 = vperm.xlu0 %1082, %v1049
          %v1084 = vpop.permute.xlu0 %1083
          %1087 = vset.pattern.permute.xlu0 0
          %1088 = vperm.xlu0 %1087, %v1050
          %v1089 = vpop.permute.xlu0 %1088
          %v1091 = vadd.f32 %v1035, %v1054
          %v1092 = vadd.f32 %v1036, %v1059
          %v1093 = vadd.f32 %v1037, %v1064
          %v1094 = vadd.f32 %v1038, %v1069
          %v1095 = vadd.f32 %v1039, %v1074
          %v1096 = vadd.f32 %v1040, %v1079
          %v1097 = vadd.f32 %v1041, %v1084
          %v1098 = vadd.f32 %v1042, %v1089
          %vm1099 = vcmask 523264
          %1100 = vst.msk [vmem:[%s216] sm:$0xff] %vm1099, %v1091
          %1101 = vst.msk [vmem:[%s216 + $0x8] sm:$0xff] %vm1099, %v1092
          %1102 = vst.msk [vmem:[%s216 + $0x10] sm:$0xff] %vm1099, %v1093
          %1103 = vst.msk [vmem:[%s216 + $0x18] sm:$0xff] %vm1099, %v1094
          %1104 = vst.msk [vmem:[%s216 + $0x20] sm:$0xff] %vm1099, %v1095
          %1105 = vst.msk [vmem:[%s216 + $0x28] sm:$0xff] %vm1099, %v1096
          %1106 = vst.msk [vmem:[%s216 + $0x30] sm:$0xff] %vm1099, %v1097
          %1107 = vst.msk [vmem:[%s216 + $0x38] sm:$0xff] %vm1099, %v1098
        $region48: #{tpu_custom_call.1} parent=27 // pred_fallthru
          _
        %s1108 = sand.u32 %s115, 1
        %s1109 = scalar_lea.sflag [#allocation6], %s1108
        %s1110 = sand.u32 %s115, 1
        %s1111 = smul.addr %s1110, 64
        %s1112 = scalar_lea.vmem [#allocation7], %s1111
        // Predicated region
        $region49: #{tpu_custom_call.1} parent=27 // pred_check
          %p1113 = pneg %p125
        $region50: #{tpu_custom_call.1} parent=27 // pred_check_branch
          %1115 = sbr.rel (%p1113) target = $region52
        $region51: #{tpu_custom_call.1} parent=27 // pred_region
          %s1116 = smul.u32 %s27, %s28
          %s1117 = smul.u32 8, %s26
          %s1119 = ssub.s32 1024, 1024
          %1120 = vsyncadd %s1109, %s1119
          %s1121 = sadd.s32 %s1116, %s1117
          %s1122 = smul.addr %s25, 8
          %s1123 = sadd.s32 %s1121, %s1122
          %s1124 = smul.addr %s1123, 128
          %s1125 = scalar_lea.hbm %s2, %s1124
          %s1126 = sshll.u32 %s1112, 4
          %s1127 = int_to_ptr.vmem [resolvable:$true] %s1126
          %1132 = dma.vmem_to_hbm [thread:$0]  %s1127, 1024, %s1125, %s1109, 128, 128, 8
        $region52: #{tpu_custom_call.1} parent=27 // pred_fallthru
          _
      $region28: #{tpu_custom_call.1} parent=5 // pred_fallthru
        _
      %p1133 = scmp.le.s32.totalorder 2, %s14
      // Predicated region
      $region53: #{tpu_custom_call.1} parent=5 // pred_check
        %p1134 = pneg %p1133
      $region54: #{tpu_custom_call.1} parent=5 // pred_check_branch
        %1136 = sbr.rel (%p1134) target = $region56
      $region55: #{tpu_custom_call.1} parent=5 // pred_region
        %s1137 = ssub.s32 %s14, 2
        // Predicated region
        $region57: #{tpu_custom_call.1} parent=55 // pred_check
          %p1138 = pneg %p131
        $region58: #{tpu_custom_call.1} parent=55 // pred_check_branch
          %1140 = sbr.rel (%p1138) target = $region60
        $region59: #{tpu_custom_call.1} parent=55 // pred_region
          %s1141 = sand.u32 %s116, 1
          %s1142 = scalar_lea.sflag [#allocation6], %s1141
          %s1143 = sand.u32 %s116, 1
          %s1144 = smul.addr %s1143, 64
          %s1145 = scalar_lea.vmem [#allocation7], %s1144
          %1146 = dma.done %s1142, 1024
        $region60: #{tpu_custom_call.1} parent=55 // pred_fallthru
          _
      $region56: #{tpu_custom_call.1} parent=5 // pred_fallthru
        _
    $region6: #{tpu_custom_call.1} parent=1 // loop_footer
      %s18 = sadd.s32 1, %s14
    $region7: #{tpu_custom_call.1} parent=1 // loop_footer_branch
      %13 = sbr.rel target = $region3
    $region8: #{tpu_custom_call.1} parent=1 // loop_exit
      _
    %1147 = vsyncpa [#allocation5], 1
    %s1148 = scalar_lea.sflag [#allocation5], 1
    %1149 = vsyncpa %s1148, 1
    %1150 = vsyncpa [#allocation6], 1
    %s1151 = scalar_lea.sflag [#allocation6], 1
    %1152 = vsyncpa %s1151, 1

</llo_original>
